<compile_context>
chip_gen: v7x
topology: tpu7x:2x2x1
jax: 0.10.0
libtpu: 0.0.40
codegen_flags: <defaults>
</compile_context>

<pallas_src>
import functools

import jax
import jax.numpy as jnp
from jax.experimental import pallas as pl
from jax.experimental.pallas import tpu as pltpu


def _cdiv(a, b):
    return -(-a // b)


def _laplacian_partial_kernel(x_ref, out_ref, *, H, W, lane_partial):
    # x_ref  : (TB, H*W)  native dtype, lane-dense flattened images
    # out_ref: (1, H*W)   per-lane partial sums        (lane_partial=True)
    #          (1, 128)   broadcast scalar partial sum (fallback)
    TB, HW = x_ref.shape
    x = x_ref[...].astype(jnp.float32)  # upcast in-kernel (no-op for f32 input)

    # Flat pixel index within each image; used to rebuild conv2d(padding=1)
    # zero-pad semantics after the cyclic lane rolls.
    k = jax.lax.broadcasted_iota(jnp.int32, (TB, HW), 1)
    j = k % W  # column index

    # Neighbor terms via XLU lane rolls (static, positive shifts) + edge masks.
    #   roll(x, s)[k] == x[k - s  (mod HW)]   (jnp.roll semantics)
    up    = jnp.where(k >= W,          pltpu.roll(x, shift=W,      axis=1), 0.0)
    down  = jnp.where(k < (H - 1) * W, pltpu.roll(x, shift=HW - W, axis=1), 0.0)
    left  = jnp.where(j != 0,          pltpu.roll(x, shift=1,      axis=1), 0.0)
    right = jnp.where(j != W - 1,      pltpu.roll(x, shift=HW - 1, axis=1), 0.0)

    a = jnp.abs((up + down) + (left + right) - 4.0 * x)

    if lane_partial:
        # Reduce only over the sublane/batch axis; keep the lane axis dense and
        # let the wrapper do the (tiny) final reduction.
        out_ref[...] = jnp.sum(a, axis=0, keepdims=True)
    else:
        out_ref[...] = jnp.broadcast_to(jnp.sum(a), (1, 128))


def laplacian_loss(x):
    """x: (N, 1, H, W), any float dtype.  Returns scalar f32 mean(|laplacian|)."""
    N, C, H, W = x.shape
    assert C == 1, "LaplacianLoss uses a single-input-channel (1,1,3,3) kernel"
    HW = H * W

    # Lane-dense layout; contiguous reshape -> no extra HBM pass.
    xf = x.reshape(N, HW)

    # ---- choose TB (images per grid step) from the *padded* VMEM footprint ----
    lane_pad = _cdiv(HW, 128) * 128
    bytes_per_img = lane_pad * x.dtype.itemsize
    budget = 2 << 20                      # ~2 MiB of padded bytes per input buffer
    cap = max(1, budget // bytes_per_img)

    G = max(1, _cdiv(N, cap))
    if N >= 16:
        G = max(G, 2)                     # keep >= 2 grid steps: dual-TC on v7x
    if G == 1:
        TB = N                            # block == full dim, no 8-alignment needed
    else:
        TB = _cdiv(_cdiv(N, G), 8) * 8    # sublane-aligned block
    Np = G * TB
    if Np != N:
        # Zero images contribute exactly 0 to the |laplacian| partial sums;
        # we still divide by the original N*C*H*W below.
        xf = jnp.concatenate([xf, jnp.zeros((Np - N, HW), xf.dtype)], axis=0)

    lane_partial = (HW % 128) == 0
    out_w = HW if lane_partial else 128

    kernel = functools.partial(
        _laplacian_partial_kernel, H=H, W=W, lane_partial=lane_partial)

    partial = pl.pallas_call(
        kernel,
        out_shape=jax.ShapeDtypeStruct((1, G * out_w), jnp.float32),
        grid=(G,),
        in_specs=[pl.BlockSpec((TB, HW), lambda i: (i, 0))],
        out_specs=pl.BlockSpec((1, out_w), lambda i: (0, i)),
        compiler_params=pltpu.CompilerParams(
            # Per-step outputs are independent -> grid axis is truly parallel.
            dimension_semantics=("parallel",),
            # 2x double-buffered ~2 MiB input blocks + a handful of f32
            # elementwise temporaries; 32 MiB is ample headroom and within
            # every generation's physical VMEM (v5e/v6e 128 MiB, v7x 64 MiB).
            vmem_limit_bytes=32 * 1024 * 1024,
        ),
    )(xf)

    if lane_partial:
        total = jnp.sum(partial)
    else:
        # Each 128-lane stripe holds one broadcast partial sum; take lane 0.
        total = jnp.sum(partial.reshape(G, 128)[:, 0])

    # mean over all N*C*H*W elements of the conv output (same shape as x).
    return total / jnp.float32(N * C * H * W)


if __name__ == "__main__":
    key = jax.random.PRNGKey(0)
    x = jax.random.normal(key, (2, 1, 16, 16), dtype=jnp.float32)

    loss = jax.jit(laplacian_loss)(x)
    jax.block_until_ready(loss)

    # Pure-JAX reference: conv2d(padding=1) with the Laplacian stencil + mean(abs).
    xi = x[:, 0]
    H, W = xi.shape[1], xi.shape[2]
    xp = jnp.pad(xi, ((0, 0), (1, 1), (1, 1)))
    ref_lap = (
        xp[:, 0:H, 1:W + 1] + xp[:, 2:H + 2, 1:W + 1]
        + xp[:, 1:H + 1, 0:W] + xp[:, 1:H + 1, 2:W + 2]
        - 4.0 * xp[:, 1:H + 1, 1:W + 1]
    )
    ref = jnp.mean(jnp.abs(ref_lap))
    assert jnp.allclose(loss, ref, rtol=1e-5, atol=1e-6), (loss, ref)

    print("KERNEL_OK")
</pallas_src>

<mosaic_0001>
module attributes {stable_mosaic.version = 11 : i64} {
  func.func @_laplacian_partial_kernel(%arg0: i32, %arg1: memref<2x256xf32, #tpu.memory_space<vmem>>, %arg2: memref<1x256xf32, #tpu.memory_space<vmem>>) attributes {dimension_semantics = [#tpu.dimension_semantics<parallel>], iteration_bounds = array<i64: 1>, scalar_prefetch = 0 : i64, scratch_operands = 0 : i64, tpu.core_type = #tpu.core_type<tc>, window_params = [{transform_indices = @transform_0, window_bounds = array<i64: 2, 256>}, {transform_indices = @transform_1, window_bounds = array<i64: 1, 256>}]} {
    %c0 = arith.constant 0 : index
    %c0_0 = arith.constant 0 : index
    %0 = vector.load %arg1[%c0, %c0_0] : memref<2x256xf32, #tpu.memory_space<vmem>>, vector<2x256xf32>
    %1 = tpu.iota {dimensions = array<i32: 1>} : vector<2x256xi32>
    %c16_i32 = arith.constant 16 : i32
    %c0_i32 = arith.constant 0 : i32
    %2 = arith.cmpi eq, %c16_i32, %c0_i32 : i32
    %c1_i32 = arith.constant 1 : i32
    %3 = arith.select %2, %c1_i32, %c16_i32 : i32
    %4 = vector.broadcast %3 : i32 to vector<2x256xi32>
    %5 = arith.remsi %1, %4 : vector<2x256xi32>
    %c0_i32_1 = arith.constant 0 : i32
    %6 = vector.broadcast %c0_i32_1 : i32 to vector<2x256xi32>
    %7 = arith.cmpi ne, %5, %6 : vector<2x256xi32>
    %c0_i32_2 = arith.constant 0 : i32
    %8 = vector.broadcast %c0_i32_2 : i32 to vector<2x256xi32>
    %9 = arith.cmpi slt, %5, %8 : vector<2x256xi32>
    %c0_i32_3 = arith.constant 0 : i32
    %10 = arith.cmpi slt, %3, %c0_i32_3 : i32
    %11 = vector.broadcast %10 : i1 to vector<2x256xi1>
    %12 = vector.broadcast %11 : vector<2x256xi1> to vector<2x256xi1>
    %13 = arith.xori %9, %12 : vector<2x256xi1>
    %14 = arith.andi %13, %7 : vector<2x256xi1>
    %15 = vector.broadcast %3 : i32 to vector<2x256xi32>
    %16 = arith.addi %5, %15 : vector<2x256xi32>
    %17 = arith.select %14, %16, %5 : vector<2x256xi1>, vector<2x256xi32>
    %c16_i32_4 = arith.constant 16 : i32
    %18 = vector.broadcast %c16_i32_4 : i32 to vector<2x256xi32>
    %19 = arith.cmpi sge, %1, %18 : vector<2x256xi32>
    %c16_i32_5 = arith.constant 16 : i32
    %20 = tpu.dynamic_rotate %0 by %c16_i32_5 dim 1 : vector<2x256xf32>, i32 -> vector<2x256xf32>
    %cst = arith.constant 0.000000e+00 : f32
    %21 = vector.broadcast %cst : f32 to vector<2x256xf32>
    %22 = arith.select %19, %20, %21 : vector<2x256xi1>, vector<2x256xf32>
    %c240_i32 = arith.constant 240 : i32
    %23 = vector.broadcast %c240_i32 : i32 to vector<2x256xi32>
    %24 = arith.cmpi slt, %1, %23 : vector<2x256xi32>
    %c240_i32_6 = arith.constant 240 : i32
    %25 = tpu.dynamic_rotate %0 by %c240_i32_6 dim 1 : vector<2x256xf32>, i32 -> vector<2x256xf32>
    %cst_7 = arith.constant 0.000000e+00 : f32
    %26 = vector.broadcast %cst_7 : f32 to vector<2x256xf32>
    %27 = arith.select %24, %25, %26 : vector<2x256xi1>, vector<2x256xf32>
    %c0_i32_8 = arith.constant 0 : i32
    %28 = vector.broadcast %c0_i32_8 : i32 to vector<2x256xi32>
    %29 = arith.cmpi ne, %17, %28 : vector<2x256xi32>
    %c1_i32_9 = arith.constant 1 : i32
    %30 = tpu.dynamic_rotate %0 by %c1_i32_9 dim 1 : vector<2x256xf32>, i32 -> vector<2x256xf32>
    %cst_10 = arith.constant 0.000000e+00 : f32
    %31 = vector.broadcast %cst_10 : f32 to vector<2x256xf32>
    %32 = arith.select %29, %30, %31 : vector<2x256xi1>, vector<2x256xf32>
    %c15_i32 = arith.constant 15 : i32
    %33 = vector.broadcast %c15_i32 : i32 to vector<2x256xi32>
    %34 = arith.cmpi ne, %17, %33 : vector<2x256xi32>
    %c255_i32 = arith.constant 255 : i32
    %35 = tpu.dynamic_rotate %0 by %c255_i32 dim 1 : vector<2x256xf32>, i32 -> vector<2x256xf32>
    %cst_11 = arith.constant 0.000000e+00 : f32
    %36 = vector.broadcast %cst_11 : f32 to vector<2x256xf32>
    %37 = arith.select %34, %35, %36 : vector<2x256xi1>, vector<2x256xf32>
    %38 = arith.addf %22, %27 : vector<2x256xf32>
    %39 = arith.addf %32, %37 : vector<2x256xf32>
    %40 = arith.addf %38, %39 : vector<2x256xf32>
    %cst_12 = arith.constant 4.000000e+00 : f32
    %41 = vector.broadcast %cst_12 : f32 to vector<2x256xf32>
    %42 = arith.mulf %41, %0 : vector<2x256xf32>
    %43 = arith.subf %40, %42 : vector<2x256xf32>
    %44 = math.absf %43 : vector<2x256xf32>
    %cst_13 = arith.constant dense<0.000000e+00> : vector<256xf32>
    %45 = vector.multi_reduction <add>, %44, %cst_13 [0] : vector<2x256xf32> to vector<256xf32>
    %46 = vector.shape_cast %45 : vector<256xf32> to vector<1x256xf32>
    %c0_14 = arith.constant 0 : index
    %c0_15 = arith.constant 0 : index
    %47 = vector.load %arg2[%c0_14, %c0_15] : memref<1x256xf32, #tpu.memory_space<vmem>>, vector<1x256xf32>
    tpu.vector_store %arg2[%c0_14, %c0_15], %46 {strides = array<i32>} : memref<1x256xf32, #tpu.memory_space<vmem>>, vector<1x256xf32>,
    return
  }
  func.func @transform_0(%arg0: i32) -> (i32, i32) {
    %c0_i32 = arith.constant 0 : i32
    %c0_i32_0 = arith.constant 0 : i32
    return %arg0, %c0_i32 : i32, i32
  }
  func.func @transform_1(%arg0: i32) -> (i32, i32) {
    %c0_i32 = arith.constant 0 : i32
    %c0_i32_0 = arith.constant 0 : i32
    return %c0_i32, %arg0 : i32, i32
  }
}

</mosaic_0001>

<llo_original>
// kernel: laplacian_loss.1
$region0: #{laplacian_loss.1}
  #allocation0 [shape = 'u32[]', space=smem, size = 0x4, offset = 0x4, fixed_abs, tag = 'smem constant byte address 0x4 - core index']
  #allocation1 [shape = 'u32[144,128]{1,0:T(1,128)}', space=vmem, size = 0x12000, scoped, tag = 'internal scratch']
  %s0 = inlined_call_operand.vmem [shape: f32[2,256], index: 0, kind: input, shape index: {}]
  %s1 = inlined_call_operand.vmem [shape: f32[1,256], index: 1, kind: output, shape index: {}]
  %s2 = sld [smem:[#allocation0]]
  $region14: #{laplacian_loss.1} parent=0
    _
  %s4 = ssub.s32 1, %s2
  %s5 = scalar_select 0, %s4, %s2
  // Predicated region
  $region2: #{laplacian_loss.1} parent=0 // pred_check
    _
  $region3: #{laplacian_loss.1} parent=0 // pred_check_branch
    %7 = sbr.rel (0) target = $region5
  $region4: #{laplacian_loss.1} parent=0 // pred_region
    _
  $region5: #{laplacian_loss.1} parent=0 // pred_fallthru
    _
  %v8 = vld [vmem:[%s0] sm:$0xf]
  %v9 = vlaneseq
  %v10 = vand.u32 %v9, 127
  %v11 = vadd.s32 %v10, 128
  %vm12 = vcmp.lt.s32.totalorder %v10, 0
  %v13 = vsub.s32 0, %v10
  %v14 = vsel %vm12, %v13, %v10
  %v15 = vshrl.u32 %v14, 4
  %v16 = vand.u32 %v14, 15
  %v17 = vsub.s32 0, %v16
  %v18 = vsel %vm12, %v17, %v16
  %vm19 = vcmp.lt.s32.totalorder %v11, 0
  %v20 = vsub.s32 0, %v11
  %v21 = vsel %vm19, %v20, %v11
  %v22 = vshrl.u32 %v21, 4
  %v23 = vand.u32 %v21, 15
  %v24 = vsub.s32 0, %v23
  %v25 = vsel %vm19, %v24, %v23
  %vm26 = vcmp.ne.s32.totalorder %v18, 0
  %vm27 = vcmp.ne.s32.totalorder %v25, 0
  %vm28 = vcmp.lt.s32.totalorder %v18, 0
  %vm29 = vcmp.lt.s32.totalorder %v25, 0
  %vm30 = vmand %vm28, %vm26
  %vm31 = vmand %vm29, %vm27
  %v32 = vadd.s32 %v18, 16
  %v33 = vadd.s32 %v25, 16
  %v34 = vsel %vm30, %v32, %v18
  %v35 = vsel %vm31, %v33, %v25
  %vm36 = vcmp.ge.s32.totalorder %v10, 16
  %vm37 = vcmp.ge.s32.totalorder %v11, 16
  %v40 = vunpack.c.l.s4 1983009808
  %v41 = vunpack.c.0.s8 %v40
  %v42 = vlaneseq
  %v43 = vshrl.u32 %v42, 7
  %v44 = vsub.s32 %v41, %v43
  %v45 = vrot.slane %v8, %v44
  %v46 = vcombine.high %v45, %v45
  %49 = vrot.lane.b32.xlu0 %v45, 16
  %v50 = vpop.permute.xlu0 %49
  %51 = vrot.lane.b32.xlu0 %v46, 16
  %v52 = vpop.permute.xlu0 %51
  %vm53 = vcmp.lt.s32.totalorder %v10, 16
  %v54 = vsel %vm53, %v50, %v52
  %v55 = vsel %vm53, %v52, %v50
  %v56 = vsel %vm36, %v55, 0.0
  %v57 = vsel %vm37, %v54, 0.0
  %vm58 = vcmp.lt.s32.totalorder %v10, 240
  %vm59 = vcmp.lt.s32.totalorder %v11, 240
  %60 = vrot.lane.b32.xlu0 %v45, 112
  %v61 = vpop.permute.xlu0 %60
  %62 = vrot.lane.b32.xlu0 %v46, 112
  %v63 = vpop.permute.xlu0 %62
  %vm64 = vcmp.lt.s32.totalorder %v10, 112
  %v65 = vsel %vm64, %v61, %v63
  %v66 = vsel %vm64, %v63, %v61
  %v67 = vsel %vm58, %v65, 0.0
  %v68 = vsel %vm59, %v66, 0.0
  %vm69 = vcmp.ne.s32.totalorder %v34, 0
  %vm70 = vcmp.ne.s32.totalorder %v35, 0
  %71 = vrot.lane.b32.xlu0 %v45, 1
  %v72 = vpop.permute.xlu0 %71
  %73 = vrot.lane.b32.xlu0 %v46, 1
  %v74 = vpop.permute.xlu0 %73
  %vm75 = vcmp.lt.s32.totalorder %v10, 1
  %v76 = vsel %vm75, %v72, %v74
  %v77 = vsel %vm75, %v74, %v72
  %v78 = vsel %vm69, %v77, 0.0
  %v79 = vsel %vm70, %v76, 0.0
  %vm80 = vcmp.ne.s32.totalorder %v34, 15
  %vm81 = vcmp.ne.s32.totalorder %v35, 15
  %82 = vrot.lane.b32.xlu0 %v45, 127
  %v83 = vpop.permute.xlu0 %82
  %84 = vrot.lane.b32.xlu0 %v46, 127
  %v85 = vpop.permute.xlu0 %84
  %vm86 = vcmp.lt.s32.totalorder %v10, 127
  %v87 = vsel %vm86, %v83, %v85
  %v88 = vsel %vm86, %v85, %v83
  %v89 = vsel %vm80, %v87, 0.0
  %v90 = vsel %vm81, %v88, 0.0
  %v91 = vadd.f32 %v56, %v67
  %v92 = vadd.f32 %v57, %v68
  %v93 = vadd.f32 %v78, %v89
  %v94 = vadd.f32 %v79, %v90
  %v95 = vadd.f32 %v91, %v93
  %v96 = vadd.f32 %v92, %v94
  %v97 = vmul.f32 %v8, 4.0
  %v100 = vunpack.c.l.s4 1983009808
  %v101 = vunpack.c.0.s8 %v100
  %v102 = vlaneseq
  %v103 = vshrl.u32 %v102, 7
  %v104 = vsub.s32 %v101, %v103
  %v105 = vrot.slane %v97, %v104
  %v106 = vcombine.high %v105, %v105
  %v109 = vsub.f32 %v95, %v105
  %v110 = vsub.f32 %v96, %v106
  %v111 = vand.u32 2147483647, %v109
  %v112 = vand.u32 2147483647, %v110
  %vm113 = vcmask 1041408
  %v114 = vsel %vm113, %v111, 0.0
  %v115 = vrot.slane %v114, 4
  %v116 = vadd.f32 %v114, %v115
  %v117 = vrot.slane %v116, 2
  %v118 = vadd.f32 %v116, %v117
  %v119 = vrot.slane %v118, 1
  %v120 = vadd.f32 %v118, %v119
  %v121 = vsel %vm113, %v112, 0.0
  %v122 = vrot.slane %v121, 4
  %v123 = vadd.f32 %v121, %v122
  %v124 = vrot.slane %v123, 2
  %v125 = vadd.f32 %v123, %v124
  %v126 = vrot.slane %v125, 1
  %v127 = vadd.f32 %v125, %v126
  %v130 = vcombine.low %v120, %v127
  %v132 = vunpack.c.l.s4 1966171168
  %v133 = vunpack.c.0.s8 %v132
  %v134 = vlaneseq
  %v135 = vshrl.u32 %v134, 7
  %v136 = vsub.s32 %v133, %v135
  %v137 = vrot.slane %v130, %v136
  %v139 = vunpack.c.l.s4 1966171168
  %v140 = vunpack.c.0.s8 %v139
  %v141 = vlaneseq
  %v142 = vshrl.u32 %v141, 7
  %v143 = vsub.s32 %v140, %v142
  %v144 = vrot.slane %v137, %v143
  %v146 = vlaneseq
  %vm147 = vcmp.ge.s32.totalorder %v146, 0
  %vm148 = vcmp.lt.s32.totalorder %v146, 256
  %vm149 = vmand %vm147, %vm148
  %150 = vst.msk [vmem:[%s1] sm:$0x3] %vm149, %v144
  // Predicated region
  $region6: #{laplacian_loss.1} parent=0 // pred_check
    _
  $region7: #{laplacian_loss.1} parent=0 // pred_check_branch
    %152 = sbr.rel (0) target = $region9
  $region8: #{laplacian_loss.1} parent=0 // pred_region
    _
  $region9: #{laplacian_loss.1} parent=0 // pred_fallthru
    _
  // Predicated region
  $region10: #{laplacian_loss.1} parent=0 // pred_check
    _
  $region11: #{laplacian_loss.1} parent=0 // pred_check_branch
    %154 = sbr.rel (0) target = $region13
  $region12: #{laplacian_loss.1} parent=0 // pred_region
    _
  $region13: #{laplacian_loss.1} parent=0 // pred_fallthru
    _

</llo_original>
